<compile_context>
chip_gen: v7x
topology: tpu7x:2x2x1
jax: 0.10.0
libtpu: 0.0.40
codegen_flags: <defaults>
</compile_context>

<pallas_src>
import functools
import numpy as np
import jax
import jax.numpy as jnp
from jax.experimental import pallas as pl
from jax.experimental.pallas import tpu as pltpu

LANE = 128
SUBLANE = 8
TARGET_ROWS = 4096   # (4096, 128) f32 slab = 2 MiB per input per grid step


def _round_up(x, m):
    return (x + m - 1) // m * m


def _matching_loss_kernel(p_ref, t_ref, m_ref, o_ref, *,
                          loss_type, rows, need_row_mask):
    """grid = (batch_blocks, slabs).

    Block shapes: inputs (bb, tr, 128); output (bb, 8, 128).  The output block
    index only depends on the batch axis, so it stays resident in VMEM across
    the slab axis and acts as a lane-dense vector accumulator per batch."""
    j = pl.program_id(1)

    @pl.when(j == 0)
    def _():
        o_ref[...] = jnp.zeros_like(o_ref)

    # Cast in-kernel; HBM traffic stays in the inputs' native dtype.
    p = p_ref[...].astype(jnp.float32)          # (bb, tr, 128)
    t = t_ref[...].astype(jnp.float32)
    m = m_ref[...].astype(jnp.float32)

    d = p - t
    du = d * m        # predict*mask     - target*mask
    dm = d - du       # predict*(1-mask) - target*(1-mask)

    if loss_type == 'l1':
        val = jnp.abs(du) + 10.0 * jnp.abs(dm)
    else:  # 'l2'
        val = du * du + 10.0 * (dm * dm)

    bb, tr, _ = p_ref.shape
    if need_row_mask:
        # Edge blocks read past the real row extent (garbage); zero those rows.
        # Must mask the final value (garbage may be NaN; 0*NaN stays NaN).
        row_ids = jax.lax.broadcasted_iota(jnp.int32, (bb, tr, LANE), 1) + j * tr
        val = jnp.where(row_ids < rows, val, 0.0)

    # (bb, tr, 128) -> (bb, tr//8, 8, 128): split is tile-aligned (no relayout);
    # the axis-1 sum is pure VPU adds, hidden under the DMA.
    o_ref[...] += jnp.sum(val.reshape(bb, tr // SUBLANE, SUBLANE, LANE), axis=1)


def matching_loss(predict, target, mask, weights=None, *,
                  loss_type='l1', is_weighted=False, target_rows=TARGET_ROWS):
    if loss_type not in ('l1', 'l2'):
        raise ValueError(f'invalid loss type {loss_type}')

    B = predict.shape[0]
    N = int(np.prod(predict.shape[1:]))

    n128 = _round_up(N, LANE)
    lane_pad = n128 - N                          # only when N % 128 != 0
    rows = n128 // LANE

    def prep(x):
        x = jnp.reshape(x, (B, N))               # no dtype cast, no copy
        if lane_pad:
            x = jnp.pad(x, ((0, 0), (0, lane_pad)))   # zeros contribute 0 loss
        return jnp.reshape(x, (B, rows, LANE))

    p3, t3, m3 = prep(predict), prep(target), prep(mask)

    # Pick tiling: either stream big row-slabs within a batch, or pack several
    # whole (small) batches into one block.  bb*tr <= target_rows either way.
    rows8 = _round_up(rows, SUBLANE)
    if rows8 >= target_rows:
        tr, bb = target_rows, 1
    else:
        tr = rows8
        bb = max(1, min(B, target_rows // tr))
    num_slabs = pl.cdiv(rows, tr)
    grid_b = pl.cdiv(B, bb)
    grid = (grid_b, num_slabs)
    need_row_mask = (rows % tr) != 0             # edge block in the row axis
    B_pad = grid_b * bb                          # output fully tiled (no partial
                                                 # output blocks); extra rows are
                                                 # sliced away in the wrapper.

    kernel = functools.partial(_matching_loss_kernel, loss_type=loss_type,
                               rows=rows, need_row_mask=need_row_mask)
    in_spec = pl.BlockSpec((bb, tr, LANE), lambda b, j: (b, j, 0))

    out = pl.pallas_call(
        kernel,
        out_shape=jax.ShapeDtypeStruct((B_pad, SUBLANE, LANE), jnp.float32),
        grid_spec=pltpu.PrefetchScalarGridSpec(
            num_scalar_prefetch=0,
            grid=grid,
            in_specs=[in_spec, in_spec, in_spec],
            out_specs=pl.BlockSpec((bb, SUBLANE, LANE), lambda b, j: (b, 0, 0)),
        ),
        compiler_params=pltpu.CompilerParams(
            # batch axis can shard across TensorCores (v7x megacore);
            # slab axis is a reduction into the resident output accumulator.
            dimension_semantics=("parallel", "arbitrary"),
            vmem_limit_bytes=32 * 1024 * 1024,
        ),
    )(p3, t3, m3)

    per_batch = jnp.sum(out[:B], axis=(1, 2))    # un-normalized per-batch sums
    if is_weighted and weights is not None:
        per_batch = per_batch * jnp.reshape(weights.astype(jnp.float32), (B,))
    return jnp.sum(per_batch) / (B * N)


def _ref_loss(p, t, m, w=None, *, loss_type='l1', is_weighted=False):
    f = jnp.abs if loss_type == 'l1' else jnp.square
    B = p.shape[0]
    lm = f(p * (1 - m) - t * (1 - m)).reshape(B, -1)
    lu = f(p * m - t * m).reshape(B, -1)
    loss = lu + 10.0 * lm
    if is_weighted and w is not None:
        loss = jnp.reshape(w, (B, 1)) * loss
    return jnp.mean(loss)


if __name__ == "__main__":
    key = jax.random.PRNGKey(0)

    def make(shape):
        nonlocal_key = jax.random.fold_in(key, int(np.prod(shape)))
        kp, kt, km, kw = jax.random.split(nonlocal_key, 4)
        p = jax.random.normal(kp, shape, jnp.float32)
        t = jax.random.normal(kt, shape, jnp.float32)
        m = (jax.random.uniform(km, shape) > 0.5).astype(jnp.float32)
        w = jax.random.uniform(kw, (shape[0],), jnp.float32)
        return p, t, m, w

    def check(shape, loss_type, is_weighted, target_rows=TARGET_ROWS):
        p, t, m, w = make(shape)
        got = jax.block_until_ready(
            matching_loss(p, t, m, w, loss_type=loss_type,
                          is_weighted=is_weighted, target_rows=target_rows))
        ref = _ref_loss(p, t, m, w, loss_type=loss_type, is_weighted=is_weighted)
        assert np.allclose(np.asarray(got), np.asarray(ref),
                           rtol=1e-5, atol=1e-5), (shape, loss_type, got, ref)

    # 1) canonical small shape, l1 unweighted (batch-packed path, aligned)
    check((2, 4, 16, 16), 'l1', False)
    # 2) same shape, l2 weighted
    check((2, 4, 16, 16), 'l2', True)
    # 3) non-128-aligned feature count: lane pad + in-kernel row mask
    check((3, 5, 7, 9), 'l1', True)
    # 4) multi-slab reduction path with a ragged final slab (target_rows=8)
    check((2, 6, 16, 16), 'l2', False, target_rows=8)
    # 5) partial batch block (B=3 packed 2-per-block, target_rows=16)
    check((3, 4, 16, 16), 'l1', False, target_rows=16)

    print("KERNEL_OK")
</pallas_src>

<mosaic_0001>
module attributes {stable_mosaic.version = 11 : i64} {
  func.func @_matching_loss_kernel(%arg0: i32, %arg1: i32, %arg2: memref<2x8x128xf32, #tpu.memory_space<vmem>>, %arg3: memref<2x8x128xf32, #tpu.memory_space<vmem>>, %arg4: memref<2x8x128xf32, #tpu.memory_space<vmem>>, %arg5: memref<2x8x128xf32, #tpu.memory_space<vmem>>) attributes {dimension_semantics = [#tpu.dimension_semantics<parallel>, #tpu.dimension_semantics<arbitrary>], iteration_bounds = array<i64: 1, 1>, scalar_prefetch = 0 : i64, scratch_operands = 0 : i64, tpu.core_type = #tpu.core_type<tc>, window_params = [{transform_indices = @transform_0, window_bounds = array<i64: 2, 8, 128>}, {transform_indices = @transform_1, window_bounds = array<i64: 2, 8, 128>}, {transform_indices = @transform_2, window_bounds = array<i64: 2, 8, 128>}, {transform_indices = @transform_3, window_bounds = array<i64: 2, 8, 128>}]} {
    %c0_i32 = arith.constant 0 : i32
    %0 = arith.cmpi eq, %arg1, %c0_i32 : i32
    %1 = arith.extui %0 : i1 to i32
    %c0_i32_0 = arith.constant 0 : i32
    %2 = arith.cmpi ne, %1, %c0_i32_0 : i32
    scf.if %2 {
      %cst_16 = arith.constant 0.000000e+00 : f32
      %19 = vector.broadcast %cst_16 : f32 to vector<2x8x128xf32>
      %c0_17 = arith.constant 0 : index
      %c0_18 = arith.constant 0 : index
      %c0_19 = arith.constant 0 : index
      %20 = vector.load %arg5[%c0_17, %c0_18, %c0_19] : memref<2x8x128xf32, #tpu.memory_space<vmem>>, vector<2x8x128xf32>
      tpu.vector_store %arg5[%c0_17, %c0_18, %c0_19], %19 {strides = array<i32>} : memref<2x8x128xf32, #tpu.memory_space<vmem>>, vector<2x8x128xf32>,
    } else {
    }
    %c0 = arith.constant 0 : index
    %c0_1 = arith.constant 0 : index
    %c0_2 = arith.constant 0 : index
    %3 = vector.load %arg2[%c0, %c0_1, %c0_2] : memref<2x8x128xf32, #tpu.memory_space<vmem>>, vector<2x8x128xf32>
    %c0_3 = arith.constant 0 : index
    %c0_4 = arith.constant 0 : index
    %c0_5 = arith.constant 0 : index
    %4 = vector.load %arg3[%c0_3, %c0_4, %c0_5] : memref<2x8x128xf32, #tpu.memory_space<vmem>>, vector<2x8x128xf32>
    %c0_6 = arith.constant 0 : index
    %c0_7 = arith.constant 0 : index
    %c0_8 = arith.constant 0 : index
    %5 = vector.load %arg4[%c0_6, %c0_7, %c0_8] : memref<2x8x128xf32, #tpu.memory_space<vmem>>, vector<2x8x128xf32>
    %6 = arith.subf %3, %4 : vector<2x8x128xf32>
    %7 = arith.mulf %6, %5 : vector<2x8x128xf32>
    %8 = arith.subf %6, %7 : vector<2x8x128xf32>
    %9 = math.absf %7 : vector<2x8x128xf32>
    %10 = math.absf %8 : vector<2x8x128xf32>
    %cst = arith.constant 1.000000e+01 : f32
    %11 = vector.broadcast %cst : f32 to vector<2x8x128xf32>
    %12 = arith.mulf %11, %10 : vector<2x8x128xf32>
    %13 = arith.addf %9, %12 : vector<2x8x128xf32>
    %c0_9 = arith.constant 0 : index
    %c0_10 = arith.constant 0 : index
    %c0_11 = arith.constant 0 : index
    %14 = vector.load %arg5[%c0_9, %c0_10, %c0_11] : memref<2x8x128xf32, #tpu.memory_space<vmem>>, vector<2x8x128xf32>
    %15 = vector.shape_cast %13 : vector<2x8x128xf32> to vector<2x1x8x128xf32>
    %cst_12 = arith.constant dense<0.000000e+00> : vector<2x8x128xf32>
    %16 = vector.multi_reduction <add>, %15, %cst_12 [1] : vector<2x1x8x128xf32> to vector<2x8x128xf32>
    %17 = arith.addf %14, %16 : vector<2x8x128xf32>
    %c0_13 = arith.constant 0 : index
    %c0_14 = arith.constant 0 : index
    %c0_15 = arith.constant 0 : index
    %18 = vector.load %arg5[%c0_13, %c0_14, %c0_15] : memref<2x8x128xf32, #tpu.memory_space<vmem>>, vector<2x8x128xf32>
    tpu.vector_store %arg5[%c0_13, %c0_14, %c0_15], %17 {strides = array<i32>} : memref<2x8x128xf32, #tpu.memory_space<vmem>>, vector<2x8x128xf32>,
    return
  }
  func.func @transform_0(%arg0: i32, %arg1: i32) -> (i32, i32, i32) {
    %c0_i32 = arith.constant 0 : i32
    %c0_i32_0 = arith.constant 0 : i32
    return %arg0, %arg1, %c0_i32 : i32, i32, i32
  }
  func.func @transform_1(%arg0: i32, %arg1: i32) -> (i32, i32, i32) {
    %c0_i32 = arith.constant 0 : i32
    %c0_i32_0 = arith.constant 0 : i32
    return %arg0, %arg1, %c0_i32 : i32, i32, i32
  }
  func.func @transform_2(%arg0: i32, %arg1: i32) -> (i32, i32, i32) {
    %c0_i32 = arith.constant 0 : i32
    %c0_i32_0 = arith.constant 0 : i32
    return %arg0, %arg1, %c0_i32 : i32, i32, i32
  }
  func.func @transform_3(%arg0: i32, %arg1: i32) -> (i32, i32, i32) {
    %c0_i32 = arith.constant 0 : i32
    %c0_i32_0 = arith.constant 0 : i32
    %c0_i32_1 = arith.constant 0 : i32
    return %arg0, %c0_i32, %c0_i32_0 : i32, i32, i32
  }
}

</mosaic_0001>

<llo_original>
// kernel: tpu_custom_call.1
$region0: #{tpu_custom_call.1}
  #allocation0 [shape = 'u32[]', space=smem, size = 0x4, offset = 0x4, fixed_abs, tag = 'smem constant byte address 0x4 - core index']
  #allocation1 [shape = 'u32[144,128]{1,0:T(1,128)}', space=vmem, size = 0x12000, scoped, tag = 'internal scratch']
  %s0 = inlined_call_operand.hbm [shape: f32[2,8,128], index: 0, kind: input, shape index: {}]
  %s1 = inlined_call_operand.hbm [shape: f32[2,8,128], index: 1, kind: input, shape index: {}]
  %s2 = inlined_call_operand.hbm [shape: f32[2,8,128], index: 2, kind: input, shape index: {}]
  %s3 = inlined_call_operand.hbm [shape: f32[2,8,128], index: 3, kind: output, shape index: {}]
  %s4 = sld [smem:[#allocation0]]
  $region38: #{tpu_custom_call.1} parent=0
    _
  %s6 = ssub.s32 1, %s4
  %s7 = scalar_select 0, %s6, %s4
  $region1: #{tpu_custom_call.1} parent=0
    #allocation2 [shape = 'u8[8192]{0}', space=vmem, size = 0x2000, scoped, tag = 'input window, operand 0, single buffered']
    #allocation3 [shape = 's32[1]{0}', space=sflag, size = 0x4, scoped, tag = 'scoped memory for tpu_custom_call.1']
    #allocation4 [shape = 's32[1]{0}', space=sflag, size = 0x4, scoped, tag = 'scoped memory for tpu_custom_call.1']
    #allocation5 [shape = 'u8[8192]{0}', space=vmem, size = 0x2000, scoped, tag = 'input window, operand 1, single buffered']
    #allocation6 [shape = 's32[1]{0}', space=sflag, size = 0x4, scoped, tag = 'scoped memory for tpu_custom_call.1']
    #allocation7 [shape = 'u8[8192]{0}', space=vmem, size = 0x2000, scoped, tag = 'input window, operand 2, single buffered']
    #allocation8 [shape = 'u8[8192]{0}', space=vmem, size = 0x2000, scoped, tag = 'output window, operand 0, single buffered']
    %8 = vsyncpa [#allocation3], 0
    %9 = vsyncpa [#allocation6], 0
    %10 = vsyncpa [#allocation4], 0
    // Predicated region
    $region2: #{tpu_custom_call.1} parent=1 // pred_check
      _
    $region3: #{tpu_custom_call.1} parent=1 // pred_check_branch
      %12 = sbr.rel (0) target = $region5
    $region4: #{tpu_custom_call.1} parent=1 // pred_region
      %s14 = ssub.s32 256, 256
      %15 = vsyncadd [#allocation3], %s14
      %s16 = sshll.u32 [#allocation2], 4
      %s17 = int_to_ptr.vmem [resolvable:$true] %s16
      %22 = dma.hbm_to_vmem [thread:$0]  %s0, 256, %s17, [#allocation3], 128, 128, 8
    $region5: #{tpu_custom_call.1} parent=1 // pred_fallthru
      _
    // Predicated region
    $region6: #{tpu_custom_call.1} parent=1 // pred_check
      _
    $region7: #{tpu_custom_call.1} parent=1 // pred_check_branch
      %24 = sbr.rel (0) target = $region9
    $region8: #{tpu_custom_call.1} parent=1 // pred_region
      %s26 = ssub.s32 256, 256
      %27 = vsyncadd [#allocation6], %s26
      %s28 = sshll.u32 [#allocation5], 4
      %s29 = int_to_ptr.vmem [resolvable:$true] %s28
      %34 = dma.hbm_to_vmem [thread:$0]  %s1, 256, %s29, [#allocation6], 128, 128, 8
    $region9: #{tpu_custom_call.1} parent=1 // pred_fallthru
      _
    // Predicated region
    $region10: #{tpu_custom_call.1} parent=1 // pred_check
      _
    $region11: #{tpu_custom_call.1} parent=1 // pred_check_branch
      %36 = sbr.rel (0) target = $region13
    $region12: #{tpu_custom_call.1} parent=1 // pred_region
      %s38 = ssub.s32 256, 256
      %39 = vsyncadd [#allocation6], %s38
      %s40 = sshll.u32 [#allocation7], 4
      %s41 = int_to_ptr.vmem [resolvable:$true] %s40
      %46 = dma.hbm_to_vmem [thread:$0]  %s2, 256, %s41, [#allocation6], 128, 128, 8
    $region13: #{tpu_custom_call.1} parent=1 // pred_fallthru
      _
    // Predicated region
    $region14: #{tpu_custom_call.1} parent=1 // pred_check
      _
    $region15: #{tpu_custom_call.1} parent=1 // pred_check_branch
      %48 = sbr.rel (0) target = $region17
    $region16: #{tpu_custom_call.1} parent=1 // pred_region
      %49 = dma.done [#allocation3], 256
    $region17: #{tpu_custom_call.1} parent=1 // pred_fallthru
      _
    // Predicated region
    $region18: #{tpu_custom_call.1} parent=1 // pred_check
      _
    $region19: #{tpu_custom_call.1} parent=1 // pred_check_branch
      %51 = sbr.rel (0) target = $region21
    $region20: #{tpu_custom_call.1} parent=1 // pred_region
      %52 = dma.done [#allocation6], 256
    $region21: #{tpu_custom_call.1} parent=1 // pred_fallthru
      _
    // Predicated region
    $region22: #{tpu_custom_call.1} parent=1 // pred_check
      _
    $region23: #{tpu_custom_call.1} parent=1 // pred_check_branch
      %54 = sbr.rel (0) target = $region25
    $region24: #{tpu_custom_call.1} parent=1 // pred_region
      %55 = dma.done [#allocation6], 256
    $region25: #{tpu_custom_call.1} parent=1 // pred_fallthru
      _
    %p56 = scmp.eq.s32.totalorder 0, 0
    // Predicated region
    $region26: #{tpu_custom_call.1} parent=1 // pred_check
      %p57 = pneg %p56
    $region27: #{tpu_custom_call.1} parent=1 // pred_check_branch
      %59 = sbr.rel (%p57) target = $region29
    $region28: #{tpu_custom_call.1} parent=1 // pred_region
      %60 = vst [vmem:[#allocation8] sm:$0xff] 0.0
      %61 = vst [vmem:[#allocation8 + $0x8] sm:$0xff] 0.0
    $region29: #{tpu_custom_call.1} parent=1 // pred_fallthru
      _
    %v62 = vld [vmem:[#allocation2] sm:$0xff]
    %v63 = vld [vmem:[#allocation2 + $0x8] sm:$0xff]
    %v64 = vld [vmem:[#allocation5] sm:$0xff]
    %v65 = vld [vmem:[#allocation5 + $0x8] sm:$0xff]
    %v66 = vld [vmem:[#allocation7] sm:$0xff]
    %v67 = vld [vmem:[#allocation7 + $0x8] sm:$0xff]
    %v68 = vsub.f32 %v62, %v64
    %v69 = vsub.f32 %v63, %v65
    %v70 = vmul.f32 %v68, %v66
    %v71 = vmul.f32 %v69, %v67
    %v72 = vsub.f32 %v68, %v70
    %v73 = vsub.f32 %v69, %v71
    %v74 = vand.u32 2147483647, %v70
    %v75 = vand.u32 2147483647, %v71
    %v76 = vand.u32 2147483647, %v72
    %v77 = vand.u32 2147483647, %v73
    %v78 = vmul.f32 %v76, 10.0
    %v79 = vmul.f32 %v77, 10.0
    %v80 = vadd.f32 %v74, %v78
    %v81 = vadd.f32 %v75, %v79
    %v82 = vld [vmem:[#allocation8] sm:$0xff]
    %v83 = vld [vmem:[#allocation8 + $0x8] sm:$0xff]
    %v84 = vadd.f32 %v80, 0.0
    %v85 = vadd.f32 %v81, 0.0
    %v86 = vadd.f32 %v82, %v84
    %v87 = vadd.f32 %v83, %v85
    %88 = vst [vmem:[#allocation8] sm:$0xff] %v86
    %89 = vst [vmem:[#allocation8 + $0x8] sm:$0xff] %v87
    // Predicated region
    $region30: #{tpu_custom_call.1} parent=1 // pred_check
      _
    $region31: #{tpu_custom_call.1} parent=1 // pred_check_branch
      %91 = sbr.rel (0) target = $region33
    $region32: #{tpu_custom_call.1} parent=1 // pred_region
      %s93 = ssub.s32 256, 256
      %94 = vsyncadd [#allocation4], %s93
      %s95 = sshll.u32 [#allocation8], 4
      %s96 = int_to_ptr.vmem [resolvable:$true] %s95
      %101 = dma.vmem_to_hbm [thread:$0]  %s96, 256, %s3, [#allocation4], 128, 128, 8
    $region33: #{tpu_custom_call.1} parent=1 // pred_fallthru
      _
    // Predicated region
    $region34: #{tpu_custom_call.1} parent=1 // pred_check
      _
    $region35: #{tpu_custom_call.1} parent=1 // pred_check_branch
      %103 = sbr.rel (0) target = $region37
    $region36: #{tpu_custom_call.1} parent=1 // pred_region
      %104 = dma.done [#allocation4], 256
    $region37: #{tpu_custom_call.1} parent=1 // pred_fallthru
      _
    %105 = vsyncpa [#allocation3], 1
    %106 = vsyncpa [#allocation6], 1
    %107 = vsyncpa [#allocation4], 1

</llo_original>
